<compile_context>
chip_gen: v6e
topology: v6e:2x2x1
jax: 0.10.0
libtpu: 0.0.40
codegen_flags: <defaults>
</compile_context>

<pallas_src>
import functools

import jax
import jax.numpy as jnp
from jax import lax
from jax.experimental import pallas as pl
from jax.experimental.pallas import tpu as pltpu

HIDDEN = 512
NUM_CLASSES = 5
SUBLANE = 8


def _round_up(n, m):
    return (n + m - 1) // m * m


def emotion_classifier_kernel(x_ref, w1_ref, b1_ref, w2_ref, b2_ref, o_ref):
    # x_ref : (tb, E)       f32 or bf16  (streamed per grid step)
    # w1_ref: (512, E)      bf16         (PyTorch layout, VMEM-resident)
    # b1_ref: (1, 512)      f32
    # w2_ref: (5, 512)      f32          (tiny; kept f32 for accuracy)
    # b2_ref: (1, 5)        f32
    # o_ref : (tb, 5)       f32
    x = x_ref[...].astype(jnp.bfloat16)

    # Linear 1 (MXU, bf16 x bf16 -> f32 acc): contract x(tb,E) with w1(512,E)
    # on axis 1 of both (PyTorch weight layout; transposed contraction is
    # native on the MXU, no wrapper-side w.T materialization).
    h = lax.dot_general(
        x, w1_ref[...],
        dimension_numbers=(((1,), (1,)), ((), ())),
        preferred_element_type=jnp.float32)
    h = jnp.maximum(h + b1_ref[...], 0.0)            # f32 bias + ReLU

    # Linear 2 (f32, negligible FLOPs): h(tb,512) x w2(5,512) -> (tb, 5).
    out = lax.dot_general(
        h, w2_ref[...],
        dimension_numbers=(((1,), (1,)), ((), ())),
        preferred_element_type=jnp.float32)
    o_ref[...] = (out + b2_ref[...]).astype(o_ref.dtype)


def prepare_params(w1, b1, w2, b2):
    """One-time layout/dtype prep of PyTorch-layout params (call at init).

    * w1 -> bf16 (halves HBM/VMEM bytes of the dominant weight; bf16 MXU path)
    * w2 / biases stay f32 (tiny; keeps layer 2 exact vs. the f32 reference)
    * biases reshaped to (1, N) for in-kernel broadcast.
    No zero-padding of the embedding dim or of the 5-class output is needed.
    """
    w1p = jnp.asarray(w1, jnp.bfloat16)                         # (512, E)
    b1p = jnp.asarray(b1, jnp.float32).reshape(1, HIDDEN)       # (1, 512)
    w2p = jnp.asarray(w2, jnp.float32)                          # (5, 512)
    b2p = jnp.asarray(b2, jnp.float32).reshape(1, NUM_CLASSES)  # (1, 5)
    return w1p, b1p, w2p, b2p


def _resident_spec(block_shape):
    """Constant-index BlockSpec: whole array resident in VMEM across the grid.

    Single-buffered (pl.Buffered(1)) when pipeline_mode is supported -
    double-buffering a constant-index block only wastes VMEM headroom.
    """
    index_map = lambda i: (0,) * len(block_shape)
    try:
        return pl.BlockSpec(block_shape, index_map, pipeline_mode=pl.Buffered(1))
    except Exception:  # older jax without pipeline_mode / Buffered: harmless
        return pl.BlockSpec(block_shape, index_map)


def _pick_tb(batch, emb):
    """Batch tile: as large as a conservative VMEM budget allows (up to 1024).

    Per-row streamed bytes: x f32 double-buffer + in-kernel bf16 copy + f32
    hidden activations + (tiny) output double buffer.  The ~24 MiB budget is
    safe against v7x's 64 MiB physical VMEM and v5e/v6e scoped defaults.
    """
    per_row = 2 * 4 * emb + 2 * emb + 4 * HIDDEN + 2 * 4 * NUM_CLASSES
    resident = HIDDEN * emb * 2 + HIDDEN * 4 + NUM_CLASSES * (HIDDEN + 1) * 4
    budget = (24 << 20) - 2 * resident
    if budget > per_row * SUBLANE:
        cap = min(1024, (budget // per_row) // SUBLANE * SUBLANE)
    else:
        cap = SUBLANE
    tb = min(_round_up(batch, SUBLANE), cap)
    # Keep >= 2 grid tiles on medium/large batches so v7x's two TensorCores
    # both get work under dimension_semantics=("parallel",).
    if batch > 256 and pl.cdiv(batch, tb) < 2:
        tb = _round_up(pl.cdiv(batch, 2), SUBLANE)
    return int(tb)


@functools.partial(jax.jit, static_argnames=("tb",))
def emotion_classifier(x, params, tb=None):
    """Forward pass matching the PyTorch module.

    x: (B, emb_size), f32 or bf16 (bf16 passes through; no wrapper casts/pads).
    params = prepare_params(w1, b1, w2, b2).  Returns (B, 5) float32.
    """
    w1p, b1p, w2p, b2p = params
    B, E = x.shape
    assert w1p.shape == (HIDDEN, E)

    if tb is None:
        tb = _pick_tb(B, E)
    grid = (pl.cdiv(B, tb),)

    # Rough VMEM footprint; raise the scoped limit only when needed (defaults
    # ~16/32/32 MiB on v5e/v6e/v7x), capped well under v7x's 64 MiB physical.
    vmem_est = (2 * tb * E * x.dtype.itemsize   # x double-buffer
                + tb * E * 2                    # in-kernel bf16 copy of x tile
                + tb * HIDDEN * 4               # hidden activations
                + 2 * HIDDEN * E * 2            # w1 (worst case double-buffered)
                + 2 * tb * NUM_CLASSES * 4      # output double-buffer
                + (1 << 20))                    # w2 / biases / misc slack
    vmem_limit = int(min(vmem_est * 5 // 4, 48 << 20)) if vmem_est > (14 << 20) else None

    out = pl.pallas_call(
        emotion_classifier_kernel,
        out_shape=jax.ShapeDtypeStruct((B, NUM_CLASSES), jnp.float32),
        grid=grid,
        in_specs=[
            pl.BlockSpec((tb, E), lambda i: (i, 0)),   # x: streamed per step
            _resident_spec((HIDDEN, E)),               # w1: VMEM-resident
            _resident_spec((1, HIDDEN)),               # b1
            _resident_spec((NUM_CLASSES, HIDDEN)),     # w2
            _resident_spec((1, NUM_CLASSES)),          # b2
        ],
        out_specs=pl.BlockSpec((tb, NUM_CLASSES), lambda i: (i, 0)),
        compiler_params=pltpu.CompilerParams(
            dimension_semantics=("parallel",),         # both TCs on v7x
            vmem_limit_bytes=vmem_limit,
        ),
    )(x, w1p, b1p, w2p, b2p)
    return out


def init_params(key, emb_size):
    """Deterministic init mirroring nn.Linear defaults (uniform +-1/sqrt(fan_in))."""
    k1, k2, k3, k4 = jax.random.split(key, 4)
    bound1 = 1.0 / (emb_size ** 0.5)
    bound2 = 1.0 / (HIDDEN ** 0.5)
    w1 = jax.random.uniform(k1, (HIDDEN, emb_size), jnp.float32, -bound1, bound1)
    b1 = jax.random.uniform(k2, (HIDDEN,), jnp.float32, -bound1, bound1)
    w2 = jax.random.uniform(k3, (NUM_CLASSES, HIDDEN), jnp.float32, -bound2, bound2)
    b2 = jax.random.uniform(k4, (NUM_CLASSES,), jnp.float32, -bound2, bound2)
    return w1, b1, w2, b2


if __name__ == "__main__":
    key = jax.random.PRNGKey(0)
    k_x, k_p = jax.random.split(key)

    batch, emb_size = 8, 32
    x = jax.random.normal(k_x, (batch, emb_size), jnp.float32)
    w1, b1, w2, b2 = init_params(k_p, emb_size)

    params = prepare_params(w1, b1, w2, b2)     # one-time layout/dtype prep
    out = jax.block_until_ready(emotion_classifier(x, params))
    assert out.shape == (batch, NUM_CLASSES)
    assert bool(jnp.all(jnp.isfinite(out)))

    # Tight check: reference with the kernel's exact quantization
    # (x, w1 in bf16 for layer 1; layer 2 fully f32).
    xq = x.astype(jnp.bfloat16).astype(jnp.float32)
    w1q = w1.astype(jnp.bfloat16).astype(jnp.float32)
    h_ref = jnp.maximum(jnp.dot(xq, w1q.T, precision="highest") + b1, 0.0)
    ref_q = jnp.dot(h_ref, w2.T, precision="highest") + b2
    assert jnp.allclose(out, ref_q, atol=2e-3, rtol=2e-3)

    # Loose sanity check against the pure-f32 PyTorch math.
    ref_f32 = (jnp.dot(jnp.maximum(jnp.dot(x, w1.T, precision="highest") + b1, 0.0),
                       w2.T, precision="highest") + b2)
    assert jnp.allclose(out, ref_f32, atol=3e-2, rtol=3e-2)

    print("KERNEL_OK")
</pallas_src>

<mosaic_0001>
module attributes {stable_mosaic.version = 11 : i64} {
  func.func @emotion_classifier_kernel(%arg0: i32, %arg1: memref<8x32xf32, #tpu.memory_space<vmem>>, %arg2: memref<512x32xbf16, #tpu.memory_space<vmem>>, %arg3: memref<1x512xf32, #tpu.memory_space<vmem>>, %arg4: memref<5x512xf32, #tpu.memory_space<vmem>>, %arg5: memref<1x5xf32, #tpu.memory_space<vmem>>, %arg6: memref<8x5xf32, #tpu.memory_space<vmem>>) attributes {dimension_semantics = [#tpu.dimension_semantics<parallel>], iteration_bounds = array<i64: 1>, scalar_prefetch = 0 : i64, scratch_operands = 0 : i64, tpu.core_type = #tpu.core_type<tc>, window_params = [{transform_indices = @transform_0, window_bounds = array<i64: 8, 32>}, {pipeline_mode = #tpu.pipeline_mode<synchronous>, transform_indices = @transform_1, window_bounds = array<i64: 512, 32>}, {pipeline_mode = #tpu.pipeline_mode<synchronous>, transform_indices = @transform_2, window_bounds = array<i64: 1, 512>}, {pipeline_mode = #tpu.pipeline_mode<synchronous>, transform_indices = @transform_3, window_bounds = array<i64: 5, 512>}, {pipeline_mode = #tpu.pipeline_mode<synchronous>, transform_indices = @transform_4, window_bounds = array<i64: 1, 5>}, {transform_indices = @transform_5, window_bounds = array<i64: 8, 5>}]} {
    %c0 = arith.constant 0 : index
    %c0_0 = arith.constant 0 : index
    %0 = vector.load %arg1[%c0, %c0_0] : memref<8x32xf32, #tpu.memory_space<vmem>>, vector<8x32xf32>
    %1 = arith.truncf %0 : vector<8x32xf32> to vector<8x32xbf16>
    %c0_1 = arith.constant 0 : index
    %c0_2 = arith.constant 0 : index
    %2 = vector.load %arg2[%c0_1, %c0_2] : memref<512x32xbf16, #tpu.memory_space<vmem>>, vector<512x32xbf16>
    %cst = arith.constant dense<0.000000e+00> : vector<8x512xf32>
    %3 = tpu.matmul %1, %2, %cst {dimension_numbers = #tpu.dot_dimension_numbers<[1], [1], [0], [0], [0, 0, 1, 0], [], []>} : vector<8x32xbf16>, vector<512x32xbf16>, vector<8x512xf32> -> vector<8x512xf32>
    %c0_3 = arith.constant 0 : index
    %c0_4 = arith.constant 0 : index
    %4 = vector.load %arg3[%c0_3, %c0_4] : memref<1x512xf32, #tpu.memory_space<vmem>>, vector<1x512xf32>
    %5 = vector.broadcast %4 : vector<1x512xf32> to vector<8x512xf32>
    %6 = arith.addf %3, %5 : vector<8x512xf32>
    %cst_5 = arith.constant 0.000000e+00 : f32
    %7 = vector.broadcast %cst_5 : f32 to vector<8x512xf32>
    %8 = arith.maximumf %6, %7 : vector<8x512xf32>
    %c0_6 = arith.constant 0 : index
    %c0_7 = arith.constant 0 : index
    %9 = vector.load %arg4[%c0_6, %c0_7] : memref<5x512xf32, #tpu.memory_space<vmem>>, vector<5x512xf32>
    %cst_8 = arith.constant dense<0.000000e+00> : vector<8x5xf32>
    %10 = tpu.matmul %8, %9, %cst_8 {dimension_numbers = #tpu.dot_dimension_numbers<[1], [1], [0], [0], [0, 0, 1, 0], [], []>} : vector<8x512xf32>, vector<5x512xf32>, vector<8x5xf32> -> vector<8x5xf32>
    %c0_9 = arith.constant 0 : index
    %c0_10 = arith.constant 0 : index
    %11 = vector.load %arg5[%c0_9, %c0_10] : memref<1x5xf32, #tpu.memory_space<vmem>>, vector<1x5xf32>
    %12 = vector.broadcast %11 : vector<1x5xf32> to vector<8x5xf32>
    %13 = arith.addf %10, %12 : vector<8x5xf32>
    %c0_11 = arith.constant 0 : index
    %c0_12 = arith.constant 0 : index
    %14 = vector.load %arg6[%c0_11, %c0_12] : memref<8x5xf32, #tpu.memory_space<vmem>>, vector<8x5xf32>
    tpu.vector_store %arg6[%c0_11, %c0_12], %13 {strides = array<i32>} : memref<8x5xf32, #tpu.memory_space<vmem>>, vector<8x5xf32>,
    return
  }
  func.func @transform_0(%arg0: i32) -> (i32, i32) {
    %c0_i32 = arith.constant 0 : i32
    %c0_i32_0 = arith.constant 0 : i32
    return %arg0, %c0_i32 : i32, i32
  }
  func.func @transform_1(%arg0: i32) -> (i32, i32) {
    %c0_i32 = arith.constant 0 : i32
    %c0_i32_0 = arith.constant 0 : i32
    %c0_i32_1 = arith.constant 0 : i32
    return %c0_i32, %c0_i32_0 : i32, i32
  }
  func.func @transform_2(%arg0: i32) -> (i32, i32) {
    %c0_i32 = arith.constant 0 : i32
    %c0_i32_0 = arith.constant 0 : i32
    %c0_i32_1 = arith.constant 0 : i32
    return %c0_i32, %c0_i32_0 : i32, i32
  }
  func.func @transform_3(%arg0: i32) -> (i32, i32) {
    %c0_i32 = arith.constant 0 : i32
    %c0_i32_0 = arith.constant 0 : i32
    %c0_i32_1 = arith.constant 0 : i32
    return %c0_i32, %c0_i32_0 : i32, i32
  }
  func.func @transform_4(%arg0: i32) -> (i32, i32) {
    %c0_i32 = arith.constant 0 : i32
    %c0_i32_0 = arith.constant 0 : i32
    %c0_i32_1 = arith.constant 0 : i32
    return %c0_i32, %c0_i32_0 : i32, i32
  }
  func.func @transform_5(%arg0: i32) -> (i32, i32) {
    %c0_i32 = arith.constant 0 : i32
    %c0_i32_0 = arith.constant 0 : i32
    return %arg0, %c0_i32 : i32, i32
  }
}

</mosaic_0001>

<llo_original>
// kernel: emotion_classifier.1
$region0: #{emotion_classifier.1}
  #allocation0 [shape = 'u32[]', space=smem, size = 0x4, offset = 0x4, fixed_abs, tag = 'smem constant byte address 0x4 - core index']
  #allocation1 [shape = 'u32[144,128]{1,0:T(1,128)}', space=vmem, size = 0x12000, scoped, tag = 'internal scratch']
  %s0 = inlined_call_operand.vmem [shape: f32[8,32], index: 0, kind: input, shape index: {}]
  %s1 = inlined_call_operand.vmem [shape: bf16[512,32], index: 1, kind: input, shape index: {}]
  %s2 = inlined_call_operand.vmem [shape: f32[1,512], index: 2, kind: input, shape index: {}]
  %s3 = inlined_call_operand.vmem [shape: f32[5,512], index: 3, kind: input, shape index: {}]
  %s4 = inlined_call_operand.vmem [shape: f32[1,5], index: 4, kind: input, shape index: {}]
  %s5 = inlined_call_operand.hbm [shape: f32[8,5], index: 5, kind: output, shape index: {}]
  %s6 = sld [smem:[#allocation0]]
  $region30: #{emotion_classifier.1} parent=0
    _
  %s8 = ssub.s32 1, %s6
  %s9 = scalar_select 0, %s8, %s6
  $region1: #{emotion_classifier.1} parent=0
    #allocation2 [shape = 'u8[4096]{0}', space=vmem, size = 0x1000, scoped, tag = 'output window, operand 0, single buffered']
    #allocation3 [shape = 's32[1]{0}', space=sflag, size = 0x4, scoped, tag = 'scoped memory for emotion_classifier.1']
    %10 = vsyncpa [#allocation3], 0
    // Predicated region
    $region2: #{emotion_classifier.1} parent=1 // pred_check
      _
    $region3: #{emotion_classifier.1} parent=1 // pred_check_branch
      %12 = sbr.rel (0) target = $region5
    $region4: #{emotion_classifier.1} parent=1 // pred_region
      _
    $region5: #{emotion_classifier.1} parent=1 // pred_fallthru
      _
    // Predicated region
    $region6: #{emotion_classifier.1} parent=1 // pred_check
      _
    $region7: #{emotion_classifier.1} parent=1 // pred_check_branch
      %14 = sbr.rel (0) target = $region9
    $region8: #{emotion_classifier.1} parent=1 // pred_region
      _
    $region9: #{emotion_classifier.1} parent=1 // pred_fallthru
      _
    // Predicated region
    $region10: #{emotion_classifier.1} parent=1 // pred_check
      _
    $region11: #{emotion_classifier.1} parent=1 // pred_check_branch
      %16 = sbr.rel (0) target = $region13
    $region12: #{emotion_classifier.1} parent=1 // pred_region
      _
    $region13: #{emotion_classifier.1} parent=1 // pred_fallthru
      _
    // Predicated region
    $region14: #{emotion_classifier.1} parent=1 // pred_check
      _
    $region15: #{emotion_classifier.1} parent=1 // pred_check_branch
      %18 = sbr.rel (0) target = $region17
    $region16: #{emotion_classifier.1} parent=1 // pred_region
      _
    $region17: #{emotion_classifier.1} parent=1 // pred_fallthru
      _
    // Predicated region
    $region18: #{emotion_classifier.1} parent=1 // pred_check
      _
    $region19: #{emotion_classifier.1} parent=1 // pred_check_branch
      %20 = sbr.rel (0) target = $region21
    $region20: #{emotion_classifier.1} parent=1 // pred_region
      _
    $region21: #{emotion_classifier.1} parent=1 // pred_fallthru
      _
    %v22 = vld [vmem:[%s0] sm:$0xff]
    %v23 = vpack.c.bf16 %v22, %v22
    %v24 = vld [vmem:[%s1] sm:$0xf]
    %v25 = vld [vmem:[%s1 + $0x4] sm:$0xf]
    %v26 = vld [vmem:[%s1 + $0x8] sm:$0xf]
    %v27 = vld [vmem:[%s1 + $0xc] sm:$0xf]
    %v28 = vld [vmem:[%s1 + $0x10] sm:$0xf]
    %v29 = vld [vmem:[%s1 + $0x14] sm:$0xf]
    %v30 = vld [vmem:[%s1 + $0x18] sm:$0xf]
    %v31 = vld [vmem:[%s1 + $0x1c] sm:$0xf]
    %v32 = vld [vmem:[%s1 + $0x20] sm:$0xf]
    %v33 = vld [vmem:[%s1 + $0x24] sm:$0xf]
    %v34 = vld [vmem:[%s1 + $0x28] sm:$0xf]
    %v35 = vld [vmem:[%s1 + $0x2c] sm:$0xf]
    %v36 = vld [vmem:[%s1 + $0x30] sm:$0xf]
    %v37 = vld [vmem:[%s1 + $0x34] sm:$0xf]
    %v38 = vld [vmem:[%s1 + $0x38] sm:$0xf]
    %v39 = vld [vmem:[%s1 + $0x3c] sm:$0xf]
    %v40 = vld [vmem:[%s1 + $0x40] sm:$0xf]
    %v41 = vld [vmem:[%s1 + $0x44] sm:$0xf]
    %v42 = vld [vmem:[%s1 + $0x48] sm:$0xf]
    %v43 = vld [vmem:[%s1 + $0x4c] sm:$0xf]
    %v44 = vld [vmem:[%s1 + $0x50] sm:$0xf]
    %v45 = vld [vmem:[%s1 + $0x54] sm:$0xf]
    %v46 = vld [vmem:[%s1 + $0x58] sm:$0xf]
    %v47 = vld [vmem:[%s1 + $0x5c] sm:$0xf]
    %v48 = vld [vmem:[%s1 + $0x60] sm:$0xf]
    %v49 = vld [vmem:[%s1 + $0x64] sm:$0xf]
    %v50 = vld [vmem:[%s1 + $0x68] sm:$0xf]
    %v51 = vld [vmem:[%s1 + $0x6c] sm:$0xf]
    %v52 = vld [vmem:[%s1 + $0x70] sm:$0xf]
    %v53 = vld [vmem:[%s1 + $0x74] sm:$0xf]
    %v54 = vld [vmem:[%s1 + $0x78] sm:$0xf]
    %v55 = vld [vmem:[%s1 + $0x7c] sm:$0xf]
    %v56 = vld [vmem:[%s1 + $0x80] sm:$0xf]
    %v57 = vld [vmem:[%s1 + $0x84] sm:$0xf]
    %v58 = vld [vmem:[%s1 + $0x88] sm:$0xf]
    %v59 = vld [vmem:[%s1 + $0x8c] sm:$0xf]
    %v60 = vld [vmem:[%s1 + $0x90] sm:$0xf]
    %v61 = vld [vmem:[%s1 + $0x94] sm:$0xf]
    %v62 = vld [vmem:[%s1 + $0x98] sm:$0xf]
    %v63 = vld [vmem:[%s1 + $0x9c] sm:$0xf]
    %v64 = vld [vmem:[%s1 + $0xa0] sm:$0xf]
    %v65 = vld [vmem:[%s1 + $0xa4] sm:$0xf]
    %v66 = vld [vmem:[%s1 + $0xa8] sm:$0xf]
    %v67 = vld [vmem:[%s1 + $0xac] sm:$0xf]
    %v68 = vld [vmem:[%s1 + $0xb0] sm:$0xf]
    %v69 = vld [vmem:[%s1 + $0xb4] sm:$0xf]
    %v70 = vld [vmem:[%s1 + $0xb8] sm:$0xf]
    %v71 = vld [vmem:[%s1 + $0xbc] sm:$0xf]
    %v72 = vld [vmem:[%s1 + $0xc0] sm:$0xf]
    %v73 = vld [vmem:[%s1 + $0xc4] sm:$0xf]
    %v74 = vld [vmem:[%s1 + $0xc8] sm:$0xf]
    %v75 = vld [vmem:[%s1 + $0xcc] sm:$0xf]
    %v76 = vld [vmem:[%s1 + $0xd0] sm:$0xf]
    %v77 = vld [vmem:[%s1 + $0xd4] sm:$0xf]
    %v78 = vld [vmem:[%s1 + $0xd8] sm:$0xf]
    %v79 = vld [vmem:[%s1 + $0xdc] sm:$0xf]
    %v80 = vld [vmem:[%s1 + $0xe0] sm:$0xf]
    %v81 = vld [vmem:[%s1 + $0xe4] sm:$0xf]
    %v82 = vld [vmem:[%s1 + $0xe8] sm:$0xf]
    %v83 = vld [vmem:[%s1 + $0xec] sm:$0xf]
    %v84 = vld [vmem:[%s1 + $0xf0] sm:$0xf]
    %v85 = vld [vmem:[%s1 + $0xf4] sm:$0xf]
    %v86 = vld [vmem:[%s1 + $0xf8] sm:$0xf]
    %v87 = vld [vmem:[%s1 + $0xfc] sm:$0xf]
    %v88 = vld [vmem:[%s2] sm:$0xf]
    %v90 = vlaneseq
    %v91 = vshrl.u32 %v90, 7
    %v92 = vsub.s32 0, %v91
    %v93 = vrot.slane %v88, %v92
    %v94 = vlaneseq
    %v95 = vshrl.u32 %v94, 7
    %v96 = vsub.s32 1, %v95
    %v97 = vrot.slane %v88, %v96
    %v98 = vlaneseq
    %v99 = vshrl.u32 %v98, 7
    %v100 = vsub.s32 2, %v99
    %v101 = vrot.slane %v88, %v100
    %v102 = vlaneseq
    %v103 = vshrl.u32 %v102, 7
    %v104 = vsub.s32 3, %v103
    %v105 = vrot.slane %v88, %v104
    %v174 = vunpack.c.l.b16 %v24
    %v175 = vunpack.c.l.b16 %v25
    %v176 = vunpack.c.l.b16 %v26
    %v177 = vunpack.c.l.b16 %v27
    %v178 = vunpack.c.l.b16 %v28
    %v179 = vunpack.c.l.b16 %v29
    %v180 = vunpack.c.l.b16 %v30
    %v181 = vunpack.c.l.b16 %v31
    %v182 = vunpack.c.l.b16 %v32
    %v183 = vunpack.c.l.b16 %v33
    %v184 = vunpack.c.l.b16 %v34
    %v185 = vunpack.c.l.b16 %v35
    %v186 = vunpack.c.l.b16 %v36
    %v187 = vunpack.c.l.b16 %v37
    %v188 = vunpack.c.l.b16 %v38
    %v189 = vunpack.c.l.b16 %v39
    %v190 = vunpack.c.l.b16 %v40
    %v191 = vunpack.c.l.b16 %v41
    %v192 = vunpack.c.l.b16 %v42
    %v193 = vunpack.c.l.b16 %v43
    %v194 = vunpack.c.l.b16 %v44
    %v195 = vunpack.c.l.b16 %v45
    %v196 = vunpack.c.l.b16 %v46
    %v197 = vunpack.c.l.b16 %v47
    %v198 = vunpack.c.l.b16 %v48
    %v199 = vunpack.c.l.b16 %v49
    %v200 = vunpack.c.l.b16 %v50
    %v201 = vunpack.c.l.b16 %v51
    %v202 = vunpack.c.l.b16 %v52
    %v203 = vunpack.c.l.b16 %v53
    %v204 = vunpack.c.l.b16 %v54
    %v205 = vunpack.c.l.b16 %v55
    %v206 = vunpack.c.l.b16 %v56
    %v207 = vunpack.c.l.b16 %v57
    %v208 = vunpack.c.l.b16 %v58
    %v209 = vunpack.c.l.b16 %v59
    %v210 = vunpack.c.l.b16 %v60
    %v211 = vunpack.c.l.b16 %v61
    %v212 = vunpack.c.l.b16 %v62
    %v213 = vunpack.c.l.b16 %v63
    %v214 = vunpack.c.l.b16 %v64
    %v215 = vunpack.c.l.b16 %v65
    %v216 = vunpack.c.l.b16 %v66
    %v217 = vunpack.c.l.b16 %v67
    %v218 = vunpack.c.l.b16 %v68
    %v219 = vunpack.c.l.b16 %v69
    %v220 = vunpack.c.l.b16 %v70
    %v221 = vunpack.c.l.b16 %v71
    %v222 = vunpack.c.l.b16 %v72
    %v223 = vunpack.c.l.b16 %v73
    %v224 = vunpack.c.l.b16 %v74
    %v225 = vunpack.c.l.b16 %v75
    %v226 = vunpack.c.l.b16 %v76
    %v227 = vunpack.c.l.b16 %v77
    %v228 = vunpack.c.l.b16 %v78
    %v229 = vunpack.c.l.b16 %v79
    %v230 = vunpack.c.l.b16 %v80
    %v231 = vunpack.c.l.b16 %v81
    %v232 = vunpack.c.l.b16 %v82
    %v233 = vunpack.c.l.b16 %v83
    %v234 = vunpack.c.l.b16 %v84
    %v235 = vunpack.c.l.b16 %v85
    %v236 = vunpack.c.l.b16 %v86
    %v237 = vunpack.c.l.b16 %v87
    %v238 = vpack.c.b16 %v175, %v174
    %v239 = vpack.c.b16 %v177, %v176
    %v240 = vpack.c.b16 %v179, %v178
    %v241 = vpack.c.b16 %v181, %v180
    %v242 = vpack.c.b16 %v183, %v182
    %v243 = vpack.c.b16 %v185, %v184
    %v244 = vpack.c.b16 %v187, %v186
    %v245 = vpack.c.b16 %v189, %v188
    %v246 = vpack.c.b16 %v191, %v190
    %v247 = vpack.c.b16 %v193, %v192
    %v248 = vpack.c.b16 %v195, %v194
    %v249 = vpack.c.b16 %v197, %v196
    %v250 = vpack.c.b16 %v199, %v198
    %v251 = vpack.c.b16 %v201, %v200
    %v252 = vpack.c.b16 %v203, %v202
    %v253 = vpack.c.b16 %v205, %v204
    %v254 = vpack.c.b16 %v207, %v206
    %v255 = vpack.c.b16 %v209, %v208
    %v256 = vpack.c.b16 %v211, %v210
    %v257 = vpack.c.b16 %v213, %v212
    %v258 = vpack.c.b16 %v215, %v214
    %v259 = vpack.c.b16 %v217, %v216
    %v260 = vpack.c.b16 %v219, %v218
    %v261 = vpack.c.b16 %v221, %v220
    %v262 = vpack.c.b16 %v223, %v222
    %v263 = vpack.c.b16 %v225, %v224
    %v264 = vpack.c.b16 %v227, %v226
    %v265 = vpack.c.b16 %v229, %v228
    %v266 = vpack.c.b16 %v231, %v230
    %v267 = vpack.c.b16 %v233, %v232
    %v268 = vpack.c.b16 %v235, %v234
    %v269 = vpack.c.b16 %v237, %v236
    %vm270 = vcmask 261120
    %v272 = vsel %vm270, %v23, 0
    %v275 = vsel %vm270, %v238, 0
    %v278 = vsel %vm270, %v239, 0
    %v281 = vsel %vm270, %v240, 0
    %v284 = vsel %vm270, %v241, 0
    %v287 = vsel %vm270, %v242, 0
    %v290 = vsel %vm270, %v243, 0
    %v293 = vsel %vm270, %v244, 0
    %v296 = vsel %vm270, %v245, 0
    %v299 = vsel %vm270, %v246, 0
    %v302 = vsel %vm270, %v247, 0
    %v305 = vsel %vm270, %v248, 0
    %v308 = vsel %vm270, %v249, 0
    %v311 = vsel %vm270, %v250, 0
    %v314 = vsel %vm270, %v251, 0
    %v317 = vsel %vm270, %v252, 0
    %v320 = vsel %vm270, %v253, 0
    %v323 = vsel %vm270, %v254, 0
    %v326 = vsel %vm270, %v255, 0
    %v329 = vsel %vm270, %v256, 0
    %v332 = vsel %vm270, %v257, 0
    %v335 = vsel %vm270, %v258, 0
    %v338 = vsel %vm270, %v259, 0
    %v341 = vsel %vm270, %v260, 0
    %v344 = vsel %vm270, %v261, 0
    %v347 = vsel %vm270, %v262, 0
    %v350 = vsel %vm270, %v263, 0
    %v353 = vsel %vm270, %v264, 0
    %v356 = vsel %vm270, %v265, 0
    %v359 = vsel %vm270, %v266, 0
    %v362 = vsel %vm270, %v267, 0
    %v365 = vsel %vm270, %v268, 0
    %v368 = vsel %vm270, %v269, 0
    %370 = vmatprep.subr.bf16.mxu0 0
    %371 = vmatpush1.bf16.xpose.msra.mxu0 %v296
    %372 = vmatprep.subr.bf16.mxu0 0
    %373 = vmatpush1.bf16.xpose.msra.mxu0 %v293
    %374 = vmatprep.subr.bf16.mxu0 0
    %375 = vmatpush1.bf16.xpose.msra.mxu0 %v290
    %376 = vmatprep.subr.bf16.mxu0 0
    %377 = vmatpush1.bf16.xpose.msra.mxu0 %v287
    %378 = vmatprep.subr.bf16.mxu0 0
    %379 = vmatpush1.bf16.xpose.msra.mxu0 %v284
    %380 = vmatprep.subr.bf16.mxu0 0
    %381 = vmatpush1.bf16.xpose.msra.mxu0 %v281
    %382 = vmatprep.subr.bf16.mxu0 0
    %383 = vmatpush1.bf16.xpose.msra.mxu0 %v278
    %384 = vmatprep.subr.bf16.mxu0 0
    %385 = vmatpush1.bf16.xpose.msra.mxu0 %v275
    %386 = vmatprep.subr.bf16.mxu0 0
    %387 = vmatpush2.bf16.xpose.msra.mxu0 %v320
    %388 = vmatprep.subr.bf16.mxu0 0
    %389 = vmatpush2.bf16.xpose.msra.mxu0 %v317
    %390 = vmatprep.subr.bf16.mxu0 0
    %391 = vmatpush2.bf16.xpose.msra.mxu0 %v314
    %392 = vmatprep.subr.bf16.mxu0 0
    %393 = vmatpush2.bf16.xpose.msra.mxu0 %v311
    %394 = vmatprep.subr.bf16.mxu0 0
    %395 = vmatpush2.bf16.xpose.msra.mxu0 %v308
    %396 = vmatprep.subr.bf16.mxu0 0
    %397 = vmatpush2.bf16.xpose.msra.mxu0 %v305
    %398 = vmatprep.subr.bf16.mxu0 0
    %399 = vmatpush2.bf16.xpose.msra.mxu0 %v302
    %400 = vmatprep.subr.bf16.mxu0 0
    %401 = vmatpush2.bf16.xpose.msra.mxu0 %v299
    %402 = vmatprep.mubr.bf16.mxu0 0
    %403 = vmatmul.mubr.bf16.gmra.mxu0 %v272
    %v404 = vpop.f32.mrf.mxu0
    %v405 = vadd.f32 %v93, %v404
    %v406 = vpop.f32.mrf.mxu0
    %v407 = vadd.f32 %v97, %v406
    %v408 = vpop.f32.mrf.mxu0
    %v409 = vpop.f32.mrf.mxu0
    %410 = vdwg.mxu0
    %411 = vmatprep.subr.bf16.mxu0 0
    %412 = vmatpush1.bf16.xpose.msra.mxu0 %v344
    %413 = vmatprep.subr.bf16.mxu0 0
    %414 = vmatpush1.bf16.xpose.msra.mxu0 %v341
    %415 = vmatprep.subr.bf16.mxu0 0
    %416 = vmatpush1.bf16.xpose.msra.mxu0 %v338
    %417 = vmatprep.subr.bf16.mxu0 0
    %418 = vmatpush1.bf16.xpose.msra.mxu0 %v335
    %419 = vmatprep.subr.bf16.mxu0 0
    %420 = vmatpush1.bf16.xpose.msra.mxu0 %v332
    %421 = vmatprep.subr.bf16.mxu0 0
    %422 = vmatpush1.bf16.xpose.msra.mxu0 %v329
    %423 = vmatprep.subr.bf16.mxu0 0
    %424 = vmatpush1.bf16.xpose.msra.mxu0 %v326
    %425 = vmatprep.subr.bf16.mxu0 0
    %426 = vmatpush1.bf16.xpose.msra.mxu0 %v323
    %427 = vmatprep.subr.bf16.mxu0 0
    %428 = vmatpush2.bf16.xpose.msra.mxu0 %v368
    %429 = vmatprep.subr.bf16.mxu0 0
    %430 = vmatpush2.bf16.xpose.msra.mxu0 %v365
    %431 = vmatprep.subr.bf16.mxu0 0
    %432 = vmatpush2.bf16.xpose.msra.mxu0 %v362
    %433 = vmatprep.subr.bf16.mxu0 0
    %434 = vmatpush2.bf16.xpose.msra.mxu0 %v359
    %435 = vmatprep.subr.bf16.mxu0 0
    %436 = vmatpush2.bf16.xpose.msra.mxu0 %v356
    %437 = vmatprep.subr.bf16.mxu0 0
    %438 = vmatpush2.bf16.xpose.msra.mxu0 %v353
    %439 = vmatprep.subr.bf16.mxu0 0
    %440 = vmatpush2.bf16.xpose.msra.mxu0 %v350
    %441 = vmatprep.subr.bf16.mxu0 0
    %442 = vmatpush2.bf16.xpose.msra.mxu0 %v347
    %443 = vmatprep.mubr.bf16.mxu0 0
    %444 = vmatmul.mubr.bf16.gmra.mxu0 %v272
    %v445 = vpop.f32.mrf.mxu0
    %v446 = vadd.f32 %v101, %v445
    %v447 = vpop.f32.mrf.mxu0
    %v448 = vadd.f32 %v105, %v447
    %v449 = vpop.f32.mrf.mxu0
    %v450 = vpop.f32.mrf.mxu0
    %451 = vdwg.mxu0
    %v452 = vmax.f32 %v405, 0.0
    %v453 = vmax.f32 %v407, 0.0
    %v454 = vmax.f32 %v446, 0.0
    %v455 = vmax.f32 %v448, 0.0
    %v456 = vld [vmem:[%s3] sm:$0x1f]
    %v457 = vld [vmem:[%s3 + $0x8] sm:$0x1f]
    %v458 = vld [vmem:[%s3 + $0x10] sm:$0x1f]
    %v459 = vld [vmem:[%s3 + $0x18] sm:$0x1f]
    %v460 = vld [vmem:[%s4] sm:$0x1]
    %v462 = vlaneseq
    %v463 = vshrl.u32 %v462, 7
    %v464 = vsub.s32 0, %v463
    %v465 = vrot.slane %v460, %v464
    %467 = vmatprep.subr.mxu0 0.0
    %468 = vmatpush1.xpose.msra.mxu0 0.0
    %469 = vmatprep.subr.mxu0 0.0
    %470 = vmatpush1.xpose.msra.mxu0 0.0
    %471 = vmatprep.subr.mxu0 0.0
    %472 = vmatpush1.xpose.msra.mxu0 0.0
    %473 = vmatprep.subr.mxu0 0.0
    %474 = vmatpush1.xpose.msra.mxu0 0.0
    %475 = vmatprep.subr.mxu0 0.0
    %476 = vmatpush1.xpose.msra.mxu0 0.0
    %477 = vmatprep.subr.mxu0 0.0
    %478 = vmatpush1.xpose.msra.mxu0 0.0
    %479 = vmatprep.subr.mxu0 0.0
    %480 = vmatpush1.xpose.msra.mxu0 0.0
    %481 = vmatprep.subr.mxu0 0.0
    %482 = vmatpush1.xpose.msra.mxu0 0.0
    %483 = vmatprep.subr.mxu0 0.0
    %484 = vmatpush1.xpose.msra.mxu0 0.0
    %485 = vmatprep.subr.mxu0 0.0
    %486 = vmatpush1.xpose.msra.mxu0 0.0
    %487 = vmatprep.subr.mxu0 0.0
    %488 = vmatpush1.xpose.msra.mxu0 0.0
    %489 = vmatprep.subr.mxu0 0.0
    %490 = vmatpush1.xpose.msra.mxu0 0.0
    %491 = vmatprep.subr.mxu0 0.0
    %492 = vmatpush1.xpose.msra.mxu0 0.0
    %493 = vmatprep.subr.mxu0 0.0
    %494 = vmatpush1.xpose.msra.mxu0 0.0
    %495 = vmatprep.subr.mxu0 0.0
    %496 = vmatpush1.xpose.msra.mxu0 0.0
    %497 = vmatprep.subr.mxu0 %v457
    %498 = vmatpush1.xpose.msra.mxu0 %v456
    %499 = vmatprep.subr.mxu0 0.0
    %500 = vmatpush2.xpose.msra.mxu0 0.0
    %501 = vmatprep.subr.mxu0 0.0
    %502 = vmatpush2.xpose.msra.mxu0 0.0
    %503 = vmatprep.subr.mxu0 0.0
    %504 = vmatpush2.xpose.msra.mxu0 0.0
    %505 = vmatprep.subr.mxu0 0.0
    %506 = vmatpush2.xpose.msra.mxu0 0.0
    %507 = vmatprep.subr.mxu0 0.0
    %508 = vmatpush2.xpose.msra.mxu0 0.0
    %509 = vmatprep.subr.mxu0 0.0
    %510 = vmatpush2.xpose.msra.mxu0 0.0
    %511 = vmatprep.subr.mxu0 0.0
    %512 = vmatpush2.xpose.msra.mxu0 0.0
    %513 = vmatprep.subr.mxu0 0.0
    %514 = vmatpush2.xpose.msra.mxu0 0.0
    %515 = vmatprep.subr.mxu0 0.0
    %516 = vmatpush2.xpose.msra.mxu0 0.0
    %517 = vmatprep.subr.mxu0 0.0
    %518 = vmatpush2.xpose.msra.mxu0 0.0
    %519 = vmatprep.subr.mxu0 0.0
    %520 = vmatpush2.xpose.msra.mxu0 0.0
    %521 = vmatprep.subr.mxu0 0.0
    %522 = vmatpush2.xpose.msra.mxu0 0.0
    %523 = vmatprep.subr.mxu0 0.0
    %524 = vmatpush2.xpose.msra.mxu0 0.0
    %525 = vmatprep.subr.mxu0 0.0
    %526 = vmatpush2.xpose.msra.mxu0 0.0
    %527 = vmatprep.subr.mxu0 0.0
    %528 = vmatpush2.xpose.msra.mxu0 0.0
    %529 = vmatprep.subr.mxu0 0.0
    %530 = vmatpush2.xpose.msra.mxu0 0.0
    %531 = vmatprep.mubr.f32.mxu0 %v453
    %532 = vmatmul.mubr.f32.gmra.mxu0 %v452
    %v533 = vpop.f32.mrf.mxu0
    %v534 = vadd.f32 %v465, %v533
    %v535 = vpop.f32.mrf.mxu0
    %536 = vdwg.mxu0
    %537 = vmatprep.subr.mxu0 0.0
    %538 = vmatpush1.xpose.msra.mxu0 0.0
    %539 = vmatprep.subr.mxu0 0.0
    %540 = vmatpush1.xpose.msra.mxu0 0.0
    %541 = vmatprep.subr.mxu0 0.0
    %542 = vmatpush1.xpose.msra.mxu0 0.0
    %543 = vmatprep.subr.mxu0 0.0
    %544 = vmatpush1.xpose.msra.mxu0 0.0
    %545 = vmatprep.subr.mxu0 0.0
    %546 = vmatpush1.xpose.msra.mxu0 0.0
    %547 = vmatprep.subr.mxu0 0.0
    %548 = vmatpush1.xpose.msra.mxu0 0.0
    %549 = vmatprep.subr.mxu0 0.0
    %550 = vmatpush1.xpose.msra.mxu0 0.0
    %551 = vmatprep.subr.mxu0 0.0
    %552 = vmatpush1.xpose.msra.mxu0 0.0
    %553 = vmatprep.subr.mxu0 0.0
    %554 = vmatpush1.xpose.msra.mxu0 0.0
    %555 = vmatprep.subr.mxu0 0.0
    %556 = vmatpush1.xpose.msra.mxu0 0.0
    %557 = vmatprep.subr.mxu0 0.0
    %558 = vmatpush1.xpose.msra.mxu0 0.0
    %559 = vmatprep.subr.mxu0 0.0
    %560 = vmatpush1.xpose.msra.mxu0 0.0
    %561 = vmatprep.subr.mxu0 0.0
    %562 = vmatpush1.xpose.msra.mxu0 0.0
    %563 = vmatprep.subr.mxu0 0.0
    %564 = vmatpush1.xpose.msra.mxu0 0.0
    %565 = vmatprep.subr.mxu0 0.0
    %566 = vmatpush1.xpose.msra.mxu0 0.0
    %567 = vmatprep.subr.mxu0 %v459
    %568 = vmatpush1.xpose.msra.mxu0 %v458
    %569 = vmatprep.subr.mxu0 0.0
    %570 = vmatpush2.xpose.msra.mxu0 0.0
    %571 = vmatprep.subr.mxu0 0.0
    %572 = vmatpush2.xpose.msra.mxu0 0.0
    %573 = vmatprep.subr.mxu0 0.0
    %574 = vmatpush2.xpose.msra.mxu0 0.0
    %575 = vmatprep.subr.mxu0 0.0
    %576 = vmatpush2.xpose.msra.mxu0 0.0
    %577 = vmatprep.subr.mxu0 0.0
    %578 = vmatpush2.xpose.msra.mxu0 0.0
    %579 = vmatprep.subr.mxu0 0.0
    %580 = vmatpush2.xpose.msra.mxu0 0.0
    %581 = vmatprep.subr.mxu0 0.0
    %582 = vmatpush2.xpose.msra.mxu0 0.0
    %583 = vmatprep.subr.mxu0 0.0
    %584 = vmatpush2.xpose.msra.mxu0 0.0
    %585 = vmatprep.subr.mxu0 0.0
    %586 = vmatpush2.xpose.msra.mxu0 0.0
    %587 = vmatprep.subr.mxu0 0.0
    %588 = vmatpush2.xpose.msra.mxu0 0.0
    %589 = vmatprep.subr.mxu0 0.0
    %590 = vmatpush2.xpose.msra.mxu0 0.0
    %591 = vmatprep.subr.mxu0 0.0
    %592 = vmatpush2.xpose.msra.mxu0 0.0
    %593 = vmatprep.subr.mxu0 0.0
    %594 = vmatpush2.xpose.msra.mxu0 0.0
    %595 = vmatprep.subr.mxu0 0.0
    %596 = vmatpush2.xpose.msra.mxu0 0.0
    %597 = vmatprep.subr.mxu0 0.0
    %598 = vmatpush2.xpose.msra.mxu0 0.0
    %599 = vmatprep.subr.mxu0 0.0
    %600 = vmatpush2.xpose.msra.mxu0 0.0
    %601 = vmatprep.mubr.f32.mxu0 %v455
    %602 = vmatmul.mubr.f32.gmra.mxu0 %v454
    %v603 = vpop.f32.mrf.mxu0
    %v604 = vadd.f32 %v534, %v603
    %v605 = vpop.f32.mrf.mxu0
    %606 = vdwg.mxu0
    %vm607 = vcmask 39936
    %608 = vst.msk [vmem:[#allocation2] sm:$0xff] %vm607, %v604
    // Predicated region
    $region22: #{emotion_classifier.1} parent=1 // pred_check
      _
    $region23: #{emotion_classifier.1} parent=1 // pred_check_branch
      %610 = sbr.rel (0) target = $region25
    $region24: #{emotion_classifier.1} parent=1 // pred_region
      %s612 = ssub.s32 128, 128
      %613 = vsyncadd [#allocation3], %s612
      %s615 = sshll.u32 [#allocation2], 4
      %s616 = int_to_ptr.vmem [resolvable:$true] %s615
      %618 = dma.vmem_to_hbm [thread:$0]  %s616, 128, %s5, [#allocation3]
    $region25: #{emotion_classifier.1} parent=1 // pred_fallthru
      _
    // Predicated region
    $region26: #{emotion_classifier.1} parent=1 // pred_check
      _
    $region27: #{emotion_classifier.1} parent=1 // pred_check_branch
      %620 = sbr.rel (0) target = $region29
    $region28: #{emotion_classifier.1} parent=1 // pred_region
      %621 = dma.done [#allocation3], 128
    $region29: #{emotion_classifier.1} parent=1 // pred_fallthru
      _
    %622 = vsyncpa [#allocation3], 1

</llo_original>
